<compile_context>
chip_gen: v7x
topology: tpu7x:2x2x1
jax: 0.10.0
libtpu: 0.0.40
codegen_flags: <defaults>
</compile_context>

<pallas_src>
import functools

import jax
import jax.numpy as jnp
from jax.experimental import pallas as pl
from jax.experimental.pallas import tpu as pltpu


def _round_up(x, m):
    return ((x + m - 1) // m) * m


def _pick_th(hidden, target):
    """Largest lane-aligned divisor of `hidden` that is <= target (or hidden)."""
    if hidden <= target:
        return hidden
    th = (min(target, hidden) // 128) * 128
    while th >= 128:
        if hidden % th == 0:
            return th
        th -= 128
    return hidden


def prepare_moe_weights(w1, w2, w3, compute_dtype=jnp.bfloat16):
    """One-time (weight-load-time) layout/dtype prep.

    PyTorch stores w1/w2/w3 as [E, hidden, dim].  The kernel wants
        w1t, w3t : [E, dim, hidden]   (x @ w1t feeds the MXU directly)
        w2c      : [E, hidden, dim]
    in the MXU compute dtype.  Doing this once here removes a full f32 read +
    bf16 write + transpose of every expert weight from every forward call.
    """
    w1t = jnp.swapaxes(w1, 1, 2).astype(compute_dtype)
    w3t = jnp.swapaxes(w3, 1, 2).astype(compute_dtype)
    w2c = w2.astype(compute_dtype)
    return w1t, w3t, w2c


def _grouped_ffn_kernel(tile_expert_ref,   # SMEM (num_tiles,) int32 (prefetch)
                        tile_valid_ref,    # SMEM (num_tiles,) int32 (prefetch)
                        x_ref,             # VMEM (tm, dim)      compute dtype
                        w1t_ref,           # VMEM (1, dim, th)   compute dtype
                        w3t_ref,           # VMEM (1, dim, th)   compute dtype
                        w2_ref,            # VMEM (1, th, dim)   compute dtype
                        o_ref,             # VMEM (tm, dim)      out dtype
                        *scratch):         # optional VMEM (tm, dim) f32 acc
    del tile_expert_ref  # consumed only by the BlockSpec index maps
    m = pl.program_id(0)
    h = pl.program_id(1)
    # f32 output accumulates directly into the resident output block; other
    # output dtypes use the f32 scratch accumulator.
    acc_ref = scratch[0] if scratch else o_ref

    @pl.when(tile_valid_ref[m] > 0)
    def _():
        x = x_ref[...]
        # (tm, dim) @ (dim, th) -> (tm, th), f32 accumulation on the MXU.
        h1 = jnp.dot(x, w1t_ref[0], preferred_element_type=jnp.float32)
        h3 = jnp.dot(x, w3t_ref[0], preferred_element_type=jnp.float32)
        # SwiGLU gate in f32 (VPU elementwise + EUP sigmoid).
        g = (h1 * jax.nn.sigmoid(h1)) * h3
        upd = jnp.dot(g.astype(w2_ref.dtype), w2_ref[0],
                      preferred_element_type=jnp.float32)

        @pl.when(h == 0)
        def _():
            acc_ref[...] = upd

        @pl.when(h > 0)
        def _():
            acc_ref[...] += upd

        if scratch:
            @pl.when(h == pl.num_programs(1) - 1)
            def _():
                o_ref[...] = acc_ref[...].astype(o_ref.dtype)


def conditional_feed_forward(x, expert_indices, w1t, w3t, w2c, *,
                             tm=None, th=None, weight_buffers=None):
    """MoE conditional FFN.

    x:              [T, dim]
    expert_indices: [T, A] int  (A = activated experts per token)
    w1t, w3t:       [E, dim, hidden]  compute dtype (from prepare_moe_weights)
    w2c:            [E, hidden, dim]  compute dtype (from prepare_moe_weights)
    returns         [T, A, dim] in x.dtype
    """
    T, dim = x.shape
    _, A = expert_indices.shape
    E, dim_w, hidden = w1t.shape
    assert dim_w == dim and w3t.shape == w1t.shape and w2c.shape == (E, hidden, dim)
    compute_dtype = w1t.dtype
    out_dtype = x.dtype
    TA = T * A

    # -------- physical VMEM & per-generation tile defaults --------
    try:
        info = pltpu.get_tpu_info()
        vmem_cap = int(getattr(info, "vmem_capacity_bytes", 64 * 2**20))
    except Exception:
        vmem_cap = 64 * 2**20  # be conservative (v7x per-TC) if unknown

    big_vmem = vmem_cap >= 100 * 2**20          # v5e / v6e (128 MiB) vs v7x (64 MiB)
    if tm is None:
        target_tm = 512 if big_vmem else 384    # keep above the HBM/MXU ridge
        cap_tm = _round_up(TA, 256) if TA >= 256 else _round_up(max(TA, 16), 16)
        tm = max(16, min(target_tm, cap_tm))
    if th is None:
        th = _pick_th(hidden, 1024 if big_vmem else 512)

    sublane_pack = {4: 8, 2: 16, 1: 32}[jnp.dtype(compute_dtype).itemsize]
    assert tm % sublane_pack == 0, (
        f"token tile {tm} must be a multiple of {sublane_pack} for {compute_dtype}")
    assert hidden % th == 0, "hidden must be divisible by the hidden tile"
    assert th == hidden or th % 128 == 0, "hidden tile must be lane-aligned"

    # -------- routing (outside the kernel, all static shapes) --------
    flat_e = expert_indices.reshape(TA).astype(jnp.int32)
    order = jnp.argsort(flat_e).astype(jnp.int32)        # pair ids grouped by expert
    sorted_e = flat_e[order]
    sorted_tok = order // A

    counts = jnp.zeros((E,), jnp.int32).at[flat_e].add(1)
    padded_counts = ((counts + tm - 1) // tm) * tm
    group_start = jnp.concatenate(
        [jnp.zeros((1,), jnp.int32), jnp.cumsum(padded_counts)[:-1]])
    unpadded_start = jnp.concatenate(
        [jnp.zeros((1,), jnp.int32), jnp.cumsum(counts)[:-1]])

    rank = jnp.arange(TA, dtype=jnp.int32) - unpadded_start[sorted_e]
    dest = group_start[sorted_e] + rank                  # (TA,) padded-row per pair

    # Static worst case for the padded row count (multiple of tm).
    P = max(_round_up(TA + min(E, TA) * (tm - 1), tm), tm)
    num_tiles = P // tm

    # Per-row-tile expert id and valid flag.  Pure-padding tiles (only at the
    # tail, since experts are bucketed contiguously) inherit the previous tile's
    # expert id via cummax so the weight block index does not change -> DMA skipped.
    tile_idx = dest // tm
    tile_expert = jnp.zeros((num_tiles,), jnp.int32).at[tile_idx].set(sorted_e)
    tile_expert = jax.lax.cummax(tile_expert, axis=0)
    tile_valid = jnp.zeros((num_tiles,), jnp.int32).at[tile_idx].set(1)

    # Gather activations into the bucketed layout (bf16 cast fused into scatter).
    xc = x.astype(compute_dtype)
    x_padded = jnp.zeros((P, dim), compute_dtype).at[dest].set(xc[sorted_tok])

    # -------- pallas_call --------
    n_h = hidden // th
    use_scratch = out_dtype != jnp.float32
    scratch_shapes = [pltpu.VMEM((tm, dim), jnp.float32)] if use_scratch else []

    def x_map(m, h, te, tv):
        # Padding tiles pin to block 0 so their activation DMA is skipped too.
        return (jnp.where(tv[m] > 0, m, 0), 0)

    def w13_map(m, h, te, tv):
        # Padding tiles pin to the previous valid tile's last hidden block.
        return (te[m], 0, jnp.where(tv[m] > 0, h, n_h - 1))

    def w2_map(m, h, te, tv):
        return (te[m], jnp.where(tv[m] > 0, h, n_h - 1), 0)

    def o_map(m, h, te, tv):
        return (m, 0)

    w_kwargs = {}
    if weight_buffers is not None and weight_buffers != 2:
        # Deeper weight buffering: only worthwhile on 128 MiB parts (v5e/v6e).
        w_kwargs = dict(pipeline_mode=pl.Buffered(weight_buffers))

    grid_spec = pltpu.PrefetchScalarGridSpec(
        num_scalar_prefetch=2,
        grid=(num_tiles, n_h),
        in_specs=[
            pl.BlockSpec((tm, dim), x_map),                    # x tile
            pl.BlockSpec((1, dim, th), w13_map, **w_kwargs),   # w1^T tile
            pl.BlockSpec((1, dim, th), w13_map, **w_kwargs),   # w3^T tile
            pl.BlockSpec((1, th, dim), w2_map, **w_kwargs),    # w2 tile
        ],
        out_specs=pl.BlockSpec((tm, dim), o_map),
        scratch_shapes=scratch_shapes,
    )

    cd_size = jnp.dtype(compute_dtype).itemsize
    out_size = jnp.dtype(out_dtype).itemsize
    wb = weight_buffers if weight_buffers is not None else 2
    vmem_need = (2 * tm * dim * cd_size                       # x tiles (dbl buf)
                 + wb * (2 * dim * th + th * dim) * cd_size   # weight tiles
                 + 2 * tm * dim * out_size                    # out tiles (dbl buf)
                 + (tm * dim * 4 if use_scratch else 0)       # f32 accumulator
                 + 4 * tm * th * 4)                           # f32 intermediates
    assert vmem_need <= int(0.95 * vmem_cap), (
        "tile footprint exceeds physical VMEM; reduce th or tm",
        vmem_need, vmem_cap)
    vmem_limit = min(int(0.9 * vmem_cap),
                     max(32 * 1024 * 1024, int(1.35 * vmem_need)))

    cost = pl.CostEstimate(
        flops=6 * P * hidden * dim,                 # three matmuls, 2 flops/MAC
        transcendentals=P * hidden,                 # sigmoid
        bytes_accessed=(num_tiles * 3 * hidden * dim * cd_size
                        + P * dim * (cd_size + out_size)),
    )

    out_padded = pl.pallas_call(
        _grouped_ffn_kernel,
        out_shape=jax.ShapeDtypeStruct((P, dim), out_dtype),
        grid_spec=grid_spec,
        compiler_params=pltpu.CompilerParams(
            dimension_semantics=("parallel", "arbitrary"),
            vmem_limit_bytes=vmem_limit),
        cost_estimate=cost,
    )(tile_expert, tile_valid, x_padded, w1t, w3t, w2c)

    # Un-bucket: original flat pair p lives at padded row inv[p].
    inv = jnp.zeros((TA,), jnp.int32).at[order].set(dest)
    return out_padded[inv].reshape(T, A, dim)


def _reference(x, expert_indices, w1, w2, w3, compute_dtype):
    """Pure-JAX port of the PyTorch forward, mirroring the kernel's precision
    (inputs/weights and the gate quantized to compute_dtype, f32 accumulation)."""
    up = lambda a: a.astype(compute_dtype).astype(jnp.float32)
    xk, w1k, w2k, w3k = up(x), up(w1), up(w2), up(w3)
    w1w = jnp.swapaxes(w1k[expert_indices], -1, -2)   # (T, A, dim, hidden)
    w3w = jnp.swapaxes(w3k[expert_indices], -1, -2)   # (T, A, dim, hidden)
    w2w = w2k[expert_indices]                          # (T, A, hidden, dim)
    hp = jax.lax.Precision.HIGHEST
    x1 = jax.nn.silu(jnp.einsum('ti,taio->tao', xk, w1w, precision=hp))
    x3 = jnp.einsum('ti,taio->tao', xk, w3w, precision=hp)
    g = up(x1 * x3)
    return jnp.einsum('tao,taoi->tai', g, w2w, precision=hp)


if __name__ == "__main__":
    # Small config consistent with the module: 8 experts, 2 activated per token,
    # lane-aligned dim/hidden.  Tiles chosen to exercise multiple row-tiles,
    # multiple experts, padding tiles, and both accumulation paths.
    T, dim, hidden, E, A = 16, 128, 256, 8, 2
    compute_dtype = jnp.bfloat16

    key = jax.random.PRNGKey(0)
    k1, k2, k3, kx, ki = jax.random.split(key, 5)
    w1 = jax.random.normal(k1, (E, hidden, dim), dtype=jnp.float32)
    w2 = jax.random.normal(k2, (E, hidden, dim), dtype=jnp.float32)
    w3 = jax.random.normal(k3, (E, hidden, dim), dtype=jnp.float32)
    x = jax.random.normal(kx, (T, dim), dtype=jnp.float32)
    expert_indices = jax.random.randint(ki, (T, A), 0, E, dtype=jnp.int32)

    # One-time weight prep (would happen at weight-load time in production).
    w1t, w3t, w2c = prepare_moe_weights(w1, w2, w3, compute_dtype)

    ffn = jax.jit(conditional_feed_forward,
                  static_argnames=("tm", "th", "weight_buffers"))

    ref = _reference(x, expert_indices, w1, w2, w3, compute_dtype)
    scale = float(jnp.max(jnp.abs(ref)))

    # (a) f32 activations, explicit small tiles: 2-step hidden reduction with
    #     direct f32 accumulation into the resident output block (no scratch).
    out_a = jax.block_until_ready(
        ffn(x, expert_indices, w1t, w3t, w2c, tm=16, th=128))
    assert out_a.shape == (T, A, dim)
    err_a = float(jnp.max(jnp.abs(out_a - ref)))
    assert err_a <= 2e-2 * scale + 1e-2, ("f32 path", err_a, scale)

    # (b) bf16 activations, automatic tile selection: single hidden step,
    #     f32 scratch accumulator, bf16 output.
    out_b = jax.block_until_ready(
        ffn(x.astype(jnp.bfloat16), expert_indices, w1t, w3t, w2c))
    assert out_b.shape == (T, A, dim)
    err_b = float(jnp.max(jnp.abs(out_b.astype(jnp.float32) - ref)))
    assert err_b <= 3e-2 * scale + 5e-2, ("bf16 path", err_b, scale)

    print("KERNEL_OK")
</pallas_src>

<mosaic_0001>
module attributes {stable_mosaic.version = 11 : i64} {
  func.func private @main(%arg0: i32) attributes {dimension_semantics = [#tpu.dimension_semantics<core_parallel>], iteration_bounds = array<i64: 2>, tpu.core_type = #tpu.core_type<sc_scalar_subcore>, window_params = []} {
    return
  }
}

module attributes {stable_mosaic.version = 11 : i64} {
  func.func private @main(%arg0: i32) attributes {dimension_semantics = [#tpu.dimension_semantics<core_parallel>], iteration_bounds = array<i64: 2>, tpu.core_type = #tpu.core_type<sc_scalar_subcore>, window_params = []} {
    return
  }
}

module attributes {stable_mosaic.version = 11 : i64} {
  func.func @_grouped_ffn_kernel(%arg0: i32, %arg1: i32, %arg2: memref<10xi32, #tpu.memory_space<smem>>, %arg3: memref<10xi32, #tpu.memory_space<smem>>, %arg4: memref<16x128xbf16, #tpu.memory_space<vmem>>, %arg5: memref<1x128x128xbf16, #tpu.memory_space<vmem>>, %arg6: memref<1x128x128xbf16, #tpu.memory_space<vmem>>, %arg7: memref<1x128x128xbf16, #tpu.memory_space<vmem>>, %arg8: memref<16x128xf32, #tpu.memory_space<vmem>>) attributes {dimension_semantics = [#tpu.dimension_semantics<parallel>, #tpu.dimension_semantics<arbitrary>], iteration_bounds = array<i64: 10, 2>, scalar_prefetch = 2 : i64, scratch_operands = 0 : i64, tpu.core_type = #tpu.core_type<tc>, window_params = [{transform_indices = @transform_0, window_bounds = array<i64: 16, 128>}, {transform_indices = @transform_1, window_bounds = array<i64: 1, 128, 128>}, {transform_indices = @transform_2, window_bounds = array<i64: 1, 128, 128>}, {transform_indices = @transform_3, window_bounds = array<i64: 1, 128, 128>}, {transform_indices = @transform_4, window_bounds = array<i64: 16, 128>}]} {
    %0 = arith.index_cast %arg0 : i32 to index
    %1 = memref.load %arg3[%0] : memref<10xi32, #tpu.memory_space<smem>>
    %c0_i32 = arith.constant 0 : i32
    %2 = arith.cmpi sgt, %1, %c0_i32 : i32
    %3 = arith.extui %2 : i1 to i32
    %c0_i32_0 = arith.constant 0 : i32
    %4 = arith.cmpi ne, %3, %c0_i32_0 : i32
    scf.if %4 {
      %c0 = arith.constant 0 : index
      %c0_1 = arith.constant 0 : index
      %5 = vector.load %arg4[%c0, %c0_1] : memref<16x128xbf16, #tpu.memory_space<vmem>>, vector<16x128xbf16>
      %c0_2 = arith.constant 0 : index
      %c0_3 = arith.constant 0 : index
      %c0_4 = arith.constant 0 : index
      %6 = vector.load %arg5[%c0_2, %c0_3, %c0_4] : memref<1x128x128xbf16, #tpu.memory_space<vmem>>, vector<1x128x128xbf16>
      %7 = vector.shape_cast %6 : vector<1x128x128xbf16> to vector<128x128xbf16>
      %cst = arith.constant dense<0.000000e+00> : vector<16x128xf32>
      %8 = tpu.matmul %5, %7, %cst {dimension_numbers = #tpu.dot_dimension_numbers<[1], [0], [0], [1], [0, 0, 1, 1], [], []>} : vector<16x128xbf16>, vector<128x128xbf16>, vector<16x128xf32> -> vector<16x128xf32>
      %c0_5 = arith.constant 0 : index
      %c0_6 = arith.constant 0 : index
      %c0_7 = arith.constant 0 : index
      %9 = vector.load %arg6[%c0_5, %c0_6, %c0_7] : memref<1x128x128xbf16, #tpu.memory_space<vmem>>, vector<1x128x128xbf16>
      %10 = vector.shape_cast %9 : vector<1x128x128xbf16> to vector<128x128xbf16>
      %cst_8 = arith.constant dense<0.000000e+00> : vector<16x128xf32>
      %11 = tpu.matmul %5, %10, %cst_8 {dimension_numbers = #tpu.dot_dimension_numbers<[1], [0], [0], [1], [0, 0, 1, 1], [], []>} : vector<16x128xbf16>, vector<128x128xbf16>, vector<16x128xf32> -> vector<16x128xf32>
      %12 = arith.negf %8 : vector<16x128xf32>
      %13 = math.exp %12 : vector<16x128xf32>
      %cst_9 = arith.constant 1.000000e+00 : f32
      %14 = vector.broadcast %cst_9 : f32 to vector<16x128xf32>
      %15 = arith.addf %14, %13 : vector<16x128xf32>
      %16 = arith.divf %14, %15 : vector<16x128xf32>
      %17 = arith.mulf %8, %16 : vector<16x128xf32>
      %18 = arith.mulf %17, %11 : vector<16x128xf32>
      %19 = arith.truncf %18 : vector<16x128xf32> to vector<16x128xbf16>
      %c0_10 = arith.constant 0 : index
      %c0_11 = arith.constant 0 : index
      %c0_12 = arith.constant 0 : index
      %20 = vector.load %arg7[%c0_10, %c0_11, %c0_12] : memref<1x128x128xbf16, #tpu.memory_space<vmem>>, vector<1x128x128xbf16>
      %21 = vector.shape_cast %20 : vector<1x128x128xbf16> to vector<128x128xbf16>
      %cst_13 = arith.constant dense<0.000000e+00> : vector<16x128xf32>
      %22 = tpu.matmul %19, %21, %cst_13 {dimension_numbers = #tpu.dot_dimension_numbers<[1], [0], [0], [1], [0, 0, 1, 1], [], []>} : vector<16x128xbf16>, vector<128x128xbf16>, vector<16x128xf32> -> vector<16x128xf32>
      %c0_i32_14 = arith.constant 0 : i32
      %23 = arith.cmpi eq, %arg1, %c0_i32_14 : i32
      %24 = arith.extui %23 : i1 to i32
      %c0_i32_15 = arith.constant 0 : i32
      %25 = arith.cmpi ne, %24, %c0_i32_15 : i32
      scf.if %25 {
        %c0_18 = arith.constant 0 : index
        %c0_19 = arith.constant 0 : index
        %29 = vector.load %arg8[%c0_18, %c0_19] : memref<16x128xf32, #tpu.memory_space<vmem>>, vector<16x128xf32>
        tpu.vector_store %arg8[%c0_18, %c0_19], %22 {strides = array<i32>} : memref<16x128xf32, #tpu.memory_space<vmem>>, vector<16x128xf32>,
      } else {
      }
      %c0_i32_16 = arith.constant 0 : i32
      %26 = arith.cmpi sgt, %arg1, %c0_i32_16 : i32
      %27 = arith.extui %26 : i1 to i32
      %c0_i32_17 = arith.constant 0 : i32
      %28 = arith.cmpi ne, %27, %c0_i32_17 : i32
      scf.if %28 {
        %c0_18 = arith.constant 0 : index
        %c0_19 = arith.constant 0 : index
        %29 = vector.load %arg8[%c0_18, %c0_19] : memref<16x128xf32, #tpu.memory_space<vmem>>, vector<16x128xf32>
        %30 = arith.addf %29, %22 : vector<16x128xf32>
        %c0_20 = arith.constant 0 : index
        %c0_21 = arith.constant 0 : index
        %31 = vector.load %arg8[%c0_20, %c0_21] : memref<16x128xf32, #tpu.memory_space<vmem>>, vector<16x128xf32>
        tpu.vector_store %arg8[%c0_20, %c0_21], %30 {strides = array<i32>} : memref<16x128xf32, #tpu.memory_space<vmem>>, vector<16x128xf32>,
      } else {
      }
    } else {
    }
    return
  }
  func.func @transform_0(%arg0: i32, %arg1: i32, %arg2: memref<10xi32, #tpu.memory_space<smem>>, %arg3: memref<10xi32, #tpu.memory_space<smem>>) -> (i32, i32) {
    %0 = arith.index_cast %arg0 : i32 to index
    %1 = memref.load %arg3[%0] : memref<10xi32, #tpu.memory_space<smem>>
    %c0_i32 = arith.constant 0 : i32
    %2 = arith.cmpi sgt, %1, %c0_i32 : i32
    %c0_i32_0 = arith.constant 0 : i32
    %3 = arith.select %2, %arg0, %c0_i32_0 : i32
    %c0_i32_1 = arith.constant 0 : i32
    %c0_i32_2 = arith.constant 0 : i32
    return %3, %c0_i32_1 : i32, i32
  }
  func.func @transform_1(%arg0: i32, %arg1: i32, %arg2: memref<10xi32, #tpu.memory_space<smem>>, %arg3: memref<10xi32, #tpu.memory_space<smem>>) -> (i32, i32, i32) {
    %0 = arith.index_cast %arg0 : i32 to index
    %1 = memref.load %arg2[%0] : memref<10xi32, #tpu.memory_space<smem>>
    %2 = arith.index_cast %arg0 : i32 to index
    %3 = memref.load %arg3[%2] : memref<10xi32, #tpu.memory_space<smem>>
    %c0_i32 = arith.constant 0 : i32
    %4 = arith.cmpi sgt, %3, %c0_i32 : i32
    %c1_i32 = arith.constant 1 : i32
    %5 = arith.select %4, %arg1, %c1_i32 : i32
    %c0_i32_0 = arith.constant 0 : i32
    %c0_i32_1 = arith.constant 0 : i32
    return %1, %c0_i32_0, %5 : i32, i32, i32
  }
  func.func @transform_2(%arg0: i32, %arg1: i32, %arg2: memref<10xi32, #tpu.memory_space<smem>>, %arg3: memref<10xi32, #tpu.memory_space<smem>>) -> (i32, i32, i32) {
    %0 = arith.index_cast %arg0 : i32 to index
    %1 = memref.load %arg2[%0] : memref<10xi32, #tpu.memory_space<smem>>
    %2 = arith.index_cast %arg0 : i32 to index
    %3 = memref.load %arg3[%2] : memref<10xi32, #tpu.memory_space<smem>>
    %c0_i32 = arith.constant 0 : i32
    %4 = arith.cmpi sgt, %3, %c0_i32 : i32
    %c1_i32 = arith.constant 1 : i32
    %5 = arith.select %4, %arg1, %c1_i32 : i32
    %c0_i32_0 = arith.constant 0 : i32
    %c0_i32_1 = arith.constant 0 : i32
    return %1, %c0_i32_0, %5 : i32, i32, i32
  }
  func.func @transform_3(%arg0: i32, %arg1: i32, %arg2: memref<10xi32, #tpu.memory_space<smem>>, %arg3: memref<10xi32, #tpu.memory_space<smem>>) -> (i32, i32, i32) {
    %0 = arith.index_cast %arg0 : i32 to index
    %1 = memref.load %arg2[%0] : memref<10xi32, #tpu.memory_space<smem>>
    %2 = arith.index_cast %arg0 : i32 to index
    %3 = memref.load %arg3[%2] : memref<10xi32, #tpu.memory_space<smem>>
    %c0_i32 = arith.constant 0 : i32
    %4 = arith.cmpi sgt, %3, %c0_i32 : i32
    %c1_i32 = arith.constant 1 : i32
    %5 = arith.select %4, %arg1, %c1_i32 : i32
    %c0_i32_0 = arith.constant 0 : i32
    %c0_i32_1 = arith.constant 0 : i32
    return %1, %5, %c0_i32_0 : i32, i32, i32
  }
  func.func @transform_4(%arg0: i32, %arg1: i32, %arg2: memref<10xi32, #tpu.memory_space<smem>>, %arg3: memref<10xi32, #tpu.memory_space<smem>>) -> (i32, i32) {
    %c0_i32 = arith.constant 0 : i32
    %c0_i32_0 = arith.constant 0 : i32
    return %arg0, %c0_i32 : i32, i32
  }
}

</mosaic_0001>

<llo_original>
// kernel: conditional_feed_forward.1
$region0: #{conditional_feed_forward.1}
  #allocation0 [shape = 'u32[]', space=smem, size = 0x4, offset = 0x4, fixed_abs, tag = 'smem constant byte address 0x4 - core index']
  #allocation1 [shape = 'u32[144,128]{1,0:T(1,128)}', space=vmem, size = 0x12000, scoped, tag = 'internal scratch']
  #allocation2 [shape = 's32[1]{0}', space=sflag, size = 0x4, scoped, tag = 'scoped memory for conditional_feed_forward.1']
  #allocation3 [shape = 'u8[512]{0}', space=smem, size = 0x200, scoped, tag = 'prefetched SMEM operand 0']
  #allocation4 [shape = 'u8[512]{0}', space=smem, size = 0x200, scoped, tag = 'prefetched SMEM operand 1']
  %s0 = inlined_call_operand.vmem [shape: s32[10], index: 0, kind: input, shape index: {}]
  %s1 = inlined_call_operand.vmem [shape: s32[10], index: 1, kind: input, shape index: {}]
  %s2 = inlined_call_operand.vmem [shape: bf16[160,128], index: 2, kind: input, shape index: {}]
  %s3 = inlined_call_operand.vmem [shape: bf16[8,128,256], index: 3, kind: input, shape index: {}]
  %s4 = inlined_call_operand.vmem [shape: bf16[8,128,256], index: 4, kind: input, shape index: {}]
  %s5 = inlined_call_operand.vmem [shape: bf16[8,256,128], index: 5, kind: input, shape index: {}]
  %s6 = inlined_call_operand.vmem [shape: f32[160,128], index: 6, kind: output, shape index: {}]
  %s7 = sld [smem:[#allocation0]]
  $region143: #{conditional_feed_forward.1} parent=0
    _
  %s9 = ssub.s32 1, %s7
  %s10 = scalar_select 0, %s9, %s7
  %s11 = sshll.u32 %s0, 4
  %s12 = int_to_ptr.vmem [resolvable:$true] %s11
  %14 = dma.vmem_to_smem %s12, 16, [#allocation3], [#allocation2]
  %s15 = sshll.u32 %s1, 4
  %s16 = int_to_ptr.vmem [resolvable:$true] %s15
  %18 = dma.vmem_to_smem %s16, 16, [#allocation4], [#allocation2]
  %19 = dma.done [#allocation2], 32
  %20 = sfence
  $region1: #{conditional_feed_forward.1} parent=0
    #allocation5 [shape = 'u8[65536]{0}', space=vmem, size = 0x10000, scoped, tag = 'input window, operand 3']
    #allocation6 [shape = 'u8[65536]{0}', space=vmem, size = 0x10000, scoped, tag = 'input window, operand 4']
    loop: start=0, step=1, limit=22
    $region2: #{conditional_feed_forward.1} parent=1 // loop_pre_header
      _
    $region3: #{conditional_feed_forward.1} parent=1 // loop_header
      %s22 = sphi 0, %s26
      %p23 = scmp.ge.s32.totalorder %s22, 22
      %s29 = sphi 0, %s41
      %s30 = sphi 0, %s37
      %s31 = sphi 0, %s29
      %s32 = sphi 0, %s30
      %s33 = sphi 0, %s31
      %s34 = sphi 0, %s32
      %s50 = sphi 0, %s52
      %s53 = sphi 0, %s50
      %s54 = sphi 0, %s53
      %s70 = sphi 0, %s54
      %s86 = sphi 0, %s88
      %s89 = sphi 0, %s86
      %s90 = sphi 0, %s89
      %s106 = sphi 0, %s90
      %s122 = sphi 0, %s124
      %s125 = sphi 0, %s122
      %s126 = sphi 0, %s125
      %s142 = sphi 0, %s126
      %s158 = sphi 0, %s160
      %s161 = sphi 0, %s158
      %s162 = sphi 0, %s161
      %s178 = sphi 0, %s162
      %s184 = sphi 0, %s186
      %s187 = sphi 0, %s184
      %s188 = sphi 0, %s187
      %s204 = sphi 0, %s188
    $region4: #{conditional_feed_forward.1} parent=1 // loop_header_branch
      %25 = sbr.rel (%p23) target = $region8
    $region5: #{conditional_feed_forward.1} parent=1 // loop_body
      %s27 = ssub.s32 %s22, 1
      %s28 = ssub.s32 %s22, 2
      %s35 = sadd.s32 1, %s30
      %p36 = scmp.ge.s32.totalorder %s35, 2
      %s37 = scalar_select %p36, 0, %s35
      %s38 = sadd.s32 1, %s29
      %s39 = scalar_select %p36, %s38, %s29
      %p40 = scmp.ge.s32.totalorder %s39, 10
      %s41 = scalar_select %p40, 0, %s39
      %s42 = sld [smem:[#allocation4 + %s29]]
      %p43 = scmp.gt.s32.totalorder %s42, 0
      %s44 = scalar_select %p43, %s29, 0
      %s45 = sld [smem:[#allocation4 + %s41]]
      %p46 = scmp.gt.s32.totalorder %s45, 0
      %s47 = scalar_select %p46, %s41, 0
      %s48 = ssub.s32 %s44, %s47
      %p49 = scmp.eq.s32.totalorder %s48, 0
      %s51 = sadd.s32 %s50, 1
      %s52 = scalar_select %p49, %s50, %s51
      %p55 = pneg %p49
      %p56 = scmp.eq.s32.totalorder %s22, 19
      %p57 = por %p55, %p56
      %p58 = scmp.ne.s32.totalorder %s50, %s53
      %p59 = scmp.eq.s32.totalorder %s22, 0
      %p60 = por %p58, %p59
      %p61 = scmp.ne.s32.totalorder %s50, %s53
      %p62 = scmp.eq.s32.totalorder %s27, 19
      %p63 = por %p61, %p62
      %p64 = scmp.ne.s32.totalorder %s53, %s54
      %p65 = scmp.eq.s32.totalorder %s27, 0
      %p66 = por %p64, %p65
      %p67 = scmp.ne.s32.totalorder %s53, %s54
      %p68 = scmp.eq.s32.totalorder %s28, 19
      %p69 = por %p67, %p68
      %p71 = scmp.ne.s32.totalorder %s54, %s70
      %p72 = scmp.eq.s32.totalorder %s28, 0
      %p73 = por %p71, %p72
      %s74 = sld [smem:[#allocation3 + %s29]]
      %s75 = sld [smem:[#allocation4 + %s29]]
      %p76 = scmp.gt.s32.totalorder %s75, 0
      %s77 = scalar_select %p76, %s30, 1
      %s78 = sld [smem:[#allocation3 + %s41]]
      %s79 = sld [smem:[#allocation4 + %s41]]
      %p80 = scmp.gt.s32.totalorder %s79, 0
      %s81 = scalar_select %p80, %s37, 1
      %s82 = ssub.s32 %s74, %s78
      %s83 = ssub.s32 %s77, %s81
      %s84 = sor.u32 %s82, %s83
      %p85 = scmp.eq.s32.totalorder %s84, 0
      %s87 = sadd.s32 %s86, 1
      %s88 = scalar_select %p85, %s86, %s87
      %p91 = pneg %p85
      %p92 = scmp.eq.s32.totalorder %s22, 19
      %p93 = por %p91, %p92
      %p94 = scmp.ne.s32.totalorder %s86, %s89
      %p95 = scmp.eq.s32.totalorder %s22, 0
      %p96 = por %p94, %p95
      %p97 = scmp.ne.s32.totalorder %s86, %s89
      %p98 = scmp.eq.s32.totalorder %s27, 19
      %p99 = por %p97, %p98
      %p100 = scmp.ne.s32.totalorder %s89, %s90
      %p101 = scmp.eq.s32.totalorder %s27, 0
      %p102 = por %p100, %p101
      %p103 = scmp.ne.s32.totalorder %s89, %s90
      %p104 = scmp.eq.s32.totalorder %s28, 19
      %p105 = por %p103, %p104
      %p107 = scmp.ne.s32.totalorder %s90, %s106
      %p108 = scmp.eq.s32.totalorder %s28, 0
      %p109 = por %p107, %p108
      %s110 = sld [smem:[#allocation3 + %s29]]
      %s111 = sld [smem:[#allocation4 + %s29]]
      %p112 = scmp.gt.s32.totalorder %s111, 0
      %s113 = scalar_select %p112, %s30, 1
      %s114 = sld [smem:[#allocation3 + %s41]]
      %s115 = sld [smem:[#allocation4 + %s41]]
      %p116 = scmp.gt.s32.totalorder %s115, 0
      %s117 = scalar_select %p116, %s37, 1
      %s118 = ssub.s32 %s110, %s114
      %s119 = ssub.s32 %s113, %s117
      %s120 = sor.u32 %s118, %s119
      %p121 = scmp.eq.s32.totalorder %s120, 0
      %s123 = sadd.s32 %s122, 1
      %s124 = scalar_select %p121, %s122, %s123
      %p127 = pneg %p121
      %p128 = scmp.eq.s32.totalorder %s22, 19
      %p129 = por %p127, %p128
      %p130 = scmp.ne.s32.totalorder %s122, %s125
      %p131 = scmp.eq.s32.totalorder %s22, 0
      %p132 = por %p130, %p131
      %p133 = scmp.ne.s32.totalorder %s122, %s125
      %p134 = scmp.eq.s32.totalorder %s27, 19
      %p135 = por %p133, %p134
      %p136 = scmp.ne.s32.totalorder %s125, %s126
      %p137 = scmp.eq.s32.totalorder %s27, 0
      %p138 = por %p136, %p137
      %p139 = scmp.ne.s32.totalorder %s125, %s126
      %p140 = scmp.eq.s32.totalorder %s28, 19
      %p141 = por %p139, %p140
      %p143 = scmp.ne.s32.totalorder %s126, %s142
      %p144 = scmp.eq.s32.totalorder %s28, 0
      %p145 = por %p143, %p144
      %s146 = sld [smem:[#allocation3 + %s29]]
      %s147 = sld [smem:[#allocation4 + %s29]]
      %p148 = scmp.gt.s32.totalorder %s147, 0
      %s149 = scalar_select %p148, %s30, 1
      %s150 = sld [smem:[#allocation3 + %s41]]
      %s151 = sld [smem:[#allocation4 + %s41]]
      %p152 = scmp.gt.s32.totalorder %s151, 0
      %s153 = scalar_select %p152, %s37, 1
      %s154 = ssub.s32 %s146, %s150
      %s155 = ssub.s32 %s149, %s153
      %s156 = sor.u32 %s154, %s155
      %p157 = scmp.eq.s32.totalorder %s156, 0
      %s159 = sadd.s32 %s158, 1
      %s160 = scalar_select %p157, %s158, %s159
      %p163 = pneg %p157
      %p164 = scmp.eq.s32.totalorder %s22, 19
      %p165 = por %p163, %p164
      %p166 = scmp.ne.s32.totalorder %s158, %s161
      %p167 = scmp.eq.s32.totalorder %s22, 0
      %p168 = por %p166, %p167
      %p169 = scmp.ne.s32.totalorder %s158, %s161
      %p170 = scmp.eq.s32.totalorder %s27, 19
      %p171 = por %p169, %p170
      %p172 = scmp.ne.s32.totalorder %s161, %s162
      %p173 = scmp.eq.s32.totalorder %s27, 0
      %p174 = por %p172, %p173
      %p175 = scmp.ne.s32.totalorder %s161, %s162
      %p176 = scmp.eq.s32.totalorder %s28, 19
      %p177 = por %p175, %p176
      %p179 = scmp.ne.s32.totalorder %s162, %s178
      %p180 = scmp.eq.s32.totalorder %s28, 0
      %p181 = por %p179, %p180
      %s182 = ssub.s32 %s29, %s41
      %p183 = scmp.eq.s32.totalorder %s182, 0
      %s185 = sadd.s32 %s184, 1
      %s186 = scalar_select %p183, %s184, %s185
      %p189 = pneg %p183
      %p190 = scmp.eq.s32.totalorder %s22, 19
      %p191 = por %p189, %p190
      %p192 = scmp.ne.s32.totalorder %s184, %s187
      %p193 = scmp.eq.s32.totalorder %s22, 0
      %p194 = por %p192, %p193
      %p195 = scmp.ne.s32.totalorder %s184, %s187
      %p196 = scmp.eq.s32.totalorder %s27, 19
      %p197 = por %p195, %p196
      %p198 = scmp.ne.s32.totalorder %s187, %s188
      %p199 = scmp.eq.s32.totalorder %s27, 0
      %p200 = por %p198, %p199
      %p201 = scmp.ne.s32.totalorder %s187, %s188
      %p202 = scmp.eq.s32.totalorder %s28, 19
      %p203 = por %p201, %p202
      %p205 = scmp.ne.s32.totalorder %s188, %s204
      %p206 = scmp.eq.s32.totalorder %s28, 0
      %p207 = por %p205, %p206
      %p208 = scmp.le.s32.totalorder 1, %s22
      %p209 = scmp.lt.s32.totalorder %s22, 21
      %p210 = pnand %p208, %p209
      %p211 = pneg %p210
      // Predicated region
      $region9: #{conditional_feed_forward.1} parent=5 // pred_check
        _
      $region10: #{conditional_feed_forward.1} parent=5 // pred_check_branch
        %213 = sbr.rel (%p210) target = $region12
      $region11: #{conditional_feed_forward.1} parent=5 // pred_region
        %s214 = ssub.s32 %s22, 1
      $region12: #{conditional_feed_forward.1} parent=5 // pred_fallthru
        _
      %p215 = scmp.lt.s32.totalorder %s22, 20
      // Predicated region
      $region13: #{conditional_feed_forward.1} parent=5 // pred_check
        %p216 = pneg %p215
      $region14: #{conditional_feed_forward.1} parent=5 // pred_check_branch
        %218 = sbr.rel (%p216) target = $region16
      $region15: #{conditional_feed_forward.1} parent=5 // pred_region
        // Predicated region
        $region17: #{conditional_feed_forward.1} parent=15 // pred_check
          %p219 = pneg %p60
        $region18: #{conditional_feed_forward.1} parent=15 // pred_check_branch
          %221 = sbr.rel (%p219) target = $region20
        $region19: #{conditional_feed_forward.1} parent=15 // pred_region
          %s222 = sld [smem:[#allocation4 + %s29]]
          %p223 = scmp.gt.s32.totalorder %s222, 0
          %s224 = scalar_select %p223, %s29, 0
          %s225 = smul.u32 2, %s224
          %p226 = scmp.lt.s32.totalorder %s225, 19
          %s227 = scalar_select %p226, %s225, 19
          %s228 = smul.addr %s227, 4
          %s229 = scalar_lea.vmem %s2, %s228
          %s230 = sld [smem:[#allocation4 + %s29]]
          %p231 = scmp.gt.s32.totalorder %s230, 0
          %s232 = scalar_select %p231, %s29, 0
          %s233 = smul.u32 2, %s232
        $region20: #{conditional_feed_forward.1} parent=15 // pred_fallthru
          _
        // Predicated region
        $region21: #{conditional_feed_forward.1} parent=15 // pred_check
          %p234 = pneg %p96
        $region22: #{conditional_feed_forward.1} parent=15 // pred_check_branch
          %236 = sbr.rel (%p234) target = $region24
        $region23: #{conditional_feed_forward.1} parent=15 // pred_region
          %s237 = sand.u32 %s86, 1
          %s238 = sand.u32 %s86, 1
          %s239 = smul.addr %s238, 64
          %s240 = scalar_lea.vmem [#allocation5], %s239
          %s241 = sld [smem:[#allocation3 + %s29]]
          %s242 = sld [smem:[#allocation4 + %s29]]
          %p243 = scmp.gt.s32.totalorder %s242, 0
          %s244 = scalar_select %p243, %s30, 1
          %s245 = smul.addr %s241, 32
          %s246 = sadd.s32 %s244, %s245
          %s247 = smul.addr %s246, 4
          %s248 = scalar_lea.vmem %s3, %s247
          // Predicated region
          $region25: #{conditional_feed_forward.1} parent=23 // pred_check
            _
          $region26: #{conditional_feed_forward.1} parent=23 // pred_check_branch
            %250 = sbr.rel (0) target = $region28
          $region27: #{conditional_feed_forward.1} parent=23 // pred_region
            // Predicated region
            $region29: #{conditional_feed_forward.1} parent=27 // pred_check
              _
            $region30: #{conditional_feed_forward.1} parent=27 // pred_check_branch
              %252 = sbr.rel target = $region32
            $region31: #{conditional_feed_forward.1} parent=27 // pred_region
              // Predicated region
              $region44: #{conditional_feed_forward.1} parent=31 // pred_check
                _
              $region45: #{conditional_feed_forward.1} parent=31 // pred_check_branch
                %297 = sbr.rel (0) target = $region47
              $region46: #{conditional_feed_forward.1} parent=31 // pred_region
                loop: start=0, step=1, limit=1
                $region48: #{conditional_feed_forward.1} parent=46 // loop_pre_header
                  _
                $region49: #{conditional_feed_forward.1} parent=46 // loop_header
                  %s299 = sphi 0, %s303
                  %p300 = scmp.ge.s32.totalorder %s299, 1
                  %s304 = sphi %s248, %s248
                  %s305 = sphi %s240, %s240
                $region50: #{conditional_feed_forward.1} parent=46 // loop_header_branch
                  %302 = sbr.rel (%p300) target = $region54
                $region51: #{conditional_feed_forward.1} parent=46 // loop_body
                  _
                $region52: #{conditional_feed_forward.1} parent=46 // loop_footer
                  %s303 = sadd.s32 1, %s299
                $region53: #{conditional_feed_forward.1} parent=46 // loop_footer_branch
                  %298 = sbr.rel target = $region49
                $region54: #{conditional_feed_forward.1} parent=46 // loop_exit
                  _
                loop: start=0, step=1, limit=1
                $region55: #{conditional_feed_forward.1} parent=46 // loop_pre_header
                  _
                $region56: #{conditional_feed_forward.1} parent=46 // loop_header
                  %s308 = sphi 0, %s312
                  %p309 = scmp.ge.s32.totalorder %s308, 1
                  %s313 = sphi %s248, %s248
                  %s314 = sphi %s240, %s240
                $region57: #{conditional_feed_forward.1} parent=46 // loop_header_branch
                  %311 = sbr.rel (%p309) target = $region61
                $region58: #{conditional_feed_forward.1} parent=46 // loop_body
                  %v315 = vld [vmem:[%s313] sm:$0xf]
                  %316 = vst [vmem:[%s314] sm:$0xf] %v315
                  %v317 = vld [vmem:[%s313 + $0x8] sm:$0xf]
                  %318 = vst [vmem:[%s314 + $0x4] sm:$0xf] %v317
                  %v319 = vld [vmem:[%s313 + $0x10] sm:$0xf]
                  %320 = vst [vmem:[%s314 + $0x8] sm:$0xf] %v319
                  %v321 = vld [vmem:[%s313 + $0x18] sm:$0xf]
                  %322 = vst [vmem:[%s314 + $0xc] sm:$0xf] %v321
                  %v323 = vld [vmem:[%s313 + $0x20] sm:$0xf]
                  %324 = vst [vmem:[%s314 + $0x10] sm:$0xf] %v323
                  %v325 = vld [vmem:[%s313 + $0x28] sm:$0xf]
                  %326 = vst [vmem:[%s314 + $0x14] sm:$0xf] %v325
                  %v327 = vld [vmem:[%s313 + $0x30] sm:$0xf]
                  %328 = vst [vmem:[%s314 + $0x18] sm:$0xf] %v327
                  %v329 = vld [vmem:[%s313 + $0x38] sm:$0xf]
                  %330 = vst [vmem:[%s314 + $0x1c] sm:$0xf] %v329
                  %v331 = vld [vmem:[%s313 + $0x40] sm:$0xf]
                  %332 = vst [vmem:[%s314 + $0x20] sm:$0xf] %v331
                  %v333 = vld [vmem:[%s313 + $0x48] sm:$0xf]
                  %334 = vst [vmem:[%s314 + $0x24] sm:$0xf] %v333
                  %v335 = vld [vmem:[%s313 + $0x50] sm:$0xf]
                  %336 = vst [vmem:[%s314 + $0x28] sm:$0xf] %v335
                  %v337 = vld [vmem:[%s313 + $0x58] sm:$0xf]
                  %338 = vst [vmem:[%s314 + $0x2c] sm:$0xf] %v337
                  %v339 = vld [vmem:[%s313 + $0x60] sm:$0xf]
                  %340 = vst [vmem:[%s314 + $0x30] sm:$0xf] %v339
                  %v341 = vld [vmem:[%s313 + $0x68] sm:$0xf]
                  %342 = vst [vmem:[%s314 + $0x34] sm:$0xf] %v341
                  %v343 = vld [vmem:[%s313 + $0x70] sm:$0xf]
                  %344 = vst [vmem:[%s314 + $0x38] sm:$0xf] %v343
                  %v345 = vld [vmem:[%s313 + $0x78] sm:$0xf]
                  %346 = vst [vmem:[%s314 + $0x3c] sm:$0xf] %v345
                $region59: #{conditional_feed_forward.1} parent=46 // loop_footer
                  %s312 = sadd.s32 1, %s308
                $region60: #{conditional_feed_forward.1} parent=46 // loop_footer_branch
                  %307 = sbr.rel target = $region56
                $region61: #{conditional_feed_forward.1} parent=46 // loop_exit
                  _
              $region47: #{conditional_feed_forward.1} parent=31 // pred_fallthru
                _
            $region32: #{conditional_feed_forward.1} parent=27 // pred_fallthru
              _
            // Predicated region
            $region33: #{conditional_feed_forward.1} parent=27 // pred_check
              _
            $region34: #{conditional_feed_forward.1} parent=27 // pred_check_branch
              %254 = sbr.rel (0) target = $region36
            $region35: #{conditional_feed_forward.1} parent=27 // pred_region
              loop: start=0, step=1, limit=1
              $region37: #{conditional_feed_forward.1} parent=35 // loop_pre_header
                _
              $region38: #{conditional_feed_forward.1} parent=35 // loop_header
                %s257 = sphi 0, %s261
                %p258 = scmp.ge.s32.totalorder %s257, 1
                %s262 = sphi %s248, %s248
                %s263 = sphi %s240, %s240
              $region39: #{conditional_feed_forward.1} parent=35 // loop_header_branch
                %260 = sbr.rel (%p258) target = $region43
              $region40: #{conditional_feed_forward.1} parent=35 // loop_body
                %v264 = vld [vmem:[%s262] sm:$0xf]
                %265 = vst [vmem:[%s263] sm:$0xf] %v264
                %v266 = vld [vmem:[%s262 + $0x8] sm:$0xf]
                %267 = vst [vmem:[%s263 + $0x4] sm:$0xf] %v266
                %v268 = vld [vmem:[%s262 + $0x10] sm:$0xf]
                %269 = vst [vmem:[%s263 + $0x8] sm:$0xf] %v268
                %v270 = vld [vmem:[%s262 + $0x18] sm:$0xf]
                %271 = vst [vmem:[%s263 + $0xc] sm:$0xf] %v270
                %v272 = vld [vmem:[%s262 + $0x20] sm:$0xf]
                %273 = vst [vmem:[%s263 + $0x10] sm:$0xf] %v272
                %v274 = vld [vmem:[%s262 + $0x28] sm:$0xf]
                %275 = vst [vmem:[%s263 + $0x14] sm:$0xf] %v274
                %v276 = vld [vmem:[%s262 + $0x30] sm:$0xf]
                %277 = vst [vmem:[%s263 + $0x18] sm:$0xf] %v276
                %v278 = vld [vmem:[%s262 + $0x38] sm:$0xf]
                %279 = vst [vmem:[%s263 + $0x1c] sm:$0xf] %v278
                %v280 = vld [vmem:[%s262 + $0x40] sm:$0xf]
                %281 = vst [vmem:[%s263 + $0x20] sm:$0xf] %v280
                %v282 = vld [vmem:[%s262 + $0x48] sm:$0xf]
                %283 = vst [vmem:[%s263 + $0x24] sm:$0xf] %v282
                %v284 = vld [vmem:[%s262 + $0x50] sm:$0xf]
                %285 = vst [vmem:[%s263 + $0x28] sm:$0xf] %v284
                %v286 = vld [vmem:[%s262 + $0x58] sm:$0xf]
                %287 = vst [vmem:[%s263 + $0x2c] sm:$0xf] %v286
                %v288 = vld [vmem:[%s262 + $0x60] sm:$0xf]
                %289 = vst [vmem:[%s263 + $0x30] sm:$0xf] %v288
                %v290 = vld [vmem:[%s262 + $0x68] sm:$0xf]
                %291 = vst [vmem:[%s263 + $0x34] sm:$0xf] %v290
                %v292 = vld [vmem:[%s262 + $0x70] sm:$0xf]
                %293 = vst [vmem:[%s263 + $0x38] sm:$0xf] %v292
                %v294 = vld [vmem:[%s262 + $0x78] sm:$0xf]
                %295 = vst [vmem:[%s263 + $0x3c] sm:$0xf] %v294
              $region41: #{conditional_feed_forward.1} parent=35 // loop_footer
                %s261 = sadd.s32 1, %s257
              $region42: #{conditional_feed_forward.1} parent=35 // loop_footer_branch
                %256 = sbr.rel target = $region38
              $region43: #{conditional_feed_forward.1} parent=35 // loop_exit
                _
            $region36: #{conditional_feed_forward.1} parent=27 // pred_fallthru
              _
          $region28: #{conditional_feed_forward.1} parent=23 // pred_fallthru
            _
          %347 = vnop
        $region24: #{conditional_feed_forward.1} parent=15 // pred_fallthru
          _
        // Predicated region
        $region62: #{conditional_feed_forward.1} parent=15 // pred_check
          %p348 = pneg %p132
        $region63: #{conditional_feed_forward.1} parent=15 // pred_check_branch
          %350 = sbr.rel (%p348) target = $region65
        $region64: #{conditional_feed_forward.1} parent=15 // pred_region
          %s351 = sand.u32 %s122, 1
          %s352 = sand.u32 %s122, 1
          %s353 = smul.addr %s352, 64
          %s354 = scalar_lea.vmem [#allocation6], %s353
          %s355 = sld [smem:[#allocation3 + %s29]]
          %s356 = sld [smem:[#allocation4 + %s29]]
          %p357 = scmp.gt.s32.totalorder %s356, 0
          %s358 = scalar_select %p357, %s30, 1
          %s359 = smul.addr %s355, 32
          %s360 = sadd.s32 %s358, %s359
          %s361 = smul.addr %s360, 4
          %s362 = scalar_lea.vmem %s4, %s361
          // Predicated region
          $region66: #{conditional_feed_forward.1} parent=64 // pred_check
            _
          $region67: #{conditional_feed_forward.1} parent=64 // pred_check_branch
            %364 = sbr.rel (0) target = $region69
          $region68: #{conditional_feed_forward.1} parent=64 // pred_region
            // Predicated region
            $region70: #{conditional_feed_forward.1} parent=68 // pred_check
              _
            $region71: #{conditional_feed_forward.1} parent=68 // pred_check_branch
              %366 = sbr.rel target = $region73
            $region72: #{conditional_feed_forward.1} parent=68 // pred_region
              // Predicated region
              $region85: #{conditional_feed_forward.1} parent=72 // pred_check
                _
              $region86: #{conditional_feed_forward.1} parent=72 // pred_check_branch
                %411 = sbr.rel (0) target = $region88
              $region87: #{conditional_feed_forward.1} parent=72 // pred_region
                loop: start=0, step=1, limit=1
                $region89: #{conditional_feed_forward.1} parent=87 // loop_pre_header
                  _
                $region90: #{conditional_feed_forward.1} parent=87 // loop_header
                  %s413 = sphi 0, %s417
                  %p414 = scmp.ge.s32.totalorder %s413, 1
                  %s418 = sphi %s362, %s362
                  %s419 = sphi %s354, %s354
                $region91: #{conditional_feed_forward.1} parent=87 // loop_header_branch
                  %416 = sbr.rel (%p414) target = $region95
                $region92: #{conditional_feed_forward.1} parent=87 // loop_body
                  _
                $region93: #{conditional_feed_forward.1} parent=87 // loop_footer
                  %s417 = sadd.s32 1, %s413
                $region94: #{conditional_feed_forward.1} parent=87 // loop_footer_branch
                  %412 = sbr.rel target = $region90
                $region95: #{conditional_feed_forward.1} parent=87 // loop_exit
                  _
                loop: start=0, step=1, limit=1
                $region96: #{conditional_feed_forward.1} parent=87 // loop_pre_header
                  _
                $region97: #{conditional_feed_forward.1} parent=87 // loop_header
                  %s422 = sphi 0, %s426
                  %p423 = scmp.ge.s32.totalorder %s422, 1
                  %s427 = sphi %s362, %s362
                  %s428 = sphi %s354, %s354
                $region98: #{conditional_feed_forward.1} parent=87 // loop_header_branch
                  %425 = sbr.rel (%p423) target = $region102
                $region99: #{conditional_feed_forward.1} parent=87 // loop_body
                  %v429 = vld [vmem:[%s427] sm:$0xf]
                  %430 = vst [vmem:[%s428] sm:$0xf] %v429
                  %v431 = vld [vmem:[%s427 + $0x8] sm:$0xf]
                  %432 = vst [vmem:[%s428 + $0x4] sm:$0xf] %v431
                  %v433 = vld [vmem:[%s427 + $0x10] sm:$0xf]
                  %434 = vst [vmem:[%s428 + $0x8] sm:$0xf] %v433
                  %v435 = vld [vmem:[%s427 + $0x18] sm:$0xf]
                  %436 = vst [vmem:[%s428 + $0xc] sm:$0xf] %v435
                  %v437 = vld [vmem:[%s427 + $0x20] sm:$0xf]
                  %438 = vst [vmem:[%s428 + $0x10] sm:$0xf] %v437
                  %v439 = vld [vmem:[%s427 + $0x28] sm:$0xf]
                  %440 = vst [vmem:[%s428 + $0x14] sm:$0xf] %v439
                  %v441 = vld [vmem:[%s427 + $0x30] sm:$0xf]
                  %442 = vst [vmem:[%s428 + $0x18] sm:$0xf] %v441
                  %v443 = vld [vmem:[%s427 + $0x38] sm:$0xf]
                  %444 = vst [vmem:[%s428 + $0x1c] sm:$0xf] %v443
                  %v445 = vld [vmem:[%s427 + $0x40] sm:$0xf]
                  %446 = vst [vmem:[%s428 + $0x20] sm:$0xf] %v445
                  %v447 = vld [vmem:[%s427 + $0x48] sm:$0xf]
                  %448 = vst [vmem:[%s428 + $0x24] sm:$0xf] %v447
                  %v449 = vld [vmem:[%s427 + $0x50] sm:$0xf]
                  %450 = vst [vmem:[%s428 + $0x28] sm:$0xf] %v449
                  %v451 = vld [vmem:[%s427 + $0x58] sm:$0xf]
                  %452 = vst [vmem:[%s428 + $0x2c] sm:$0xf] %v451
                  %v453 = vld [vmem:[%s427 + $0x60] sm:$0xf]
                  %454 = vst [vmem:[%s428 + $0x30] sm:$0xf] %v453
                  %v455 = vld [vmem:[%s427 + $0x68] sm:$0xf]
                  %456 = vst [vmem:[%s428 + $0x34] sm:$0xf] %v455
                  %v457 = vld [vmem:[%s427 + $0x70] sm:$0xf]
                  %458 = vst [vmem:[%s428 + $0x38] sm:$0xf] %v457
                  %v459 = vld [vmem:[%s427 + $0x78] sm:$0xf]
                  %460 = vst [vmem:[%s428 + $0x3c] sm:$0xf] %v459
                $region100: #{conditional_feed_forward.1} parent=87 // loop_footer
                  %s426 = sadd.s32 1, %s422
                $region101: #{conditional_feed_forward.1} parent=87 // loop_footer_branch
                  %421 = sbr.rel target = $region97
                $region102: #{conditional_feed_forward.1} parent=87 // loop_exit
                  _
              $region88: #{conditional_feed_forward.1} parent=72 // pred_fallthru
                _
            $region73: #{conditional_feed_forward.1} parent=68 // pred_fallthru
              _
            // Predicated region
            $region74: #{conditional_feed_forward.1} parent=68 // pred_check
              _
            $region75: #{conditional_feed_forward.1} parent=68 // pred_check_branch
              %368 = sbr.rel (0) target = $region77
            $region76: #{conditional_feed_forward.1} parent=68 // pred_region
              loop: start=0, step=1, limit=1
              $region78: #{conditional_feed_forward.1} parent=76 // loop_pre_header
                _
              $region79: #{conditional_feed_forward.1} parent=76 // loop_header
                %s371 = sphi 0, %s375
                %p372 = scmp.ge.s32.totalorder %s371, 1
                %s376 = sphi %s362, %s362
                %s377 = sphi %s354, %s354
              $region80: #{conditional_feed_forward.1} parent=76 // loop_header_branch
                %374 = sbr.rel (%p372) target = $region84
              $region81: #{conditional_feed_forward.1} parent=76 // loop_body
                %v378 = vld [vmem:[%s376] sm:$0xf]
                %379 = vst [vmem:[%s377] sm:$0xf] %v378
                %v380 = vld [vmem:[%s376 + $0x8] sm:$0xf]
                %381 = vst [vmem:[%s377 + $0x4] sm:$0xf] %v380
                %v382 = vld [vmem:[%s376 + $0x10] sm:$0xf]
                %383 = vst [vmem:[%s377 + $0x8] sm:$0xf] %v382
                %v384 = vld [vmem:[%s376 + $0x18] sm:$0xf]
                %385 = vst [vmem:[%s377 + $0xc] sm:$0xf] %v384
                %v386 = vld [vmem:[%s376 + $0x20] sm:$0xf]
                %387 = vst [vmem:[%s377 + $0x10] sm:$0xf] %v386
                %v388 = vld [vmem:[%s376 + $0x28] sm:$0xf]
                %389 = vst [vmem:[%s377 + $0x14] sm:$0xf] %v388
                %v390 = vld [vmem:[%s376 + $0x30] sm:$0xf]
                %391 = vst [vmem:[%s377 + $0x18] sm:$0xf] %v390
                %v392 = vld [vmem:[%s376 + $0x38] sm:$0xf]
                %393 = vst [vmem:[%s377 + $0x1c] sm:$0xf] %v392
                %v394 = vld [vmem:[%s376 + $0x40] sm:$0xf]
                %395 = vst [vmem:[%s377 + $0x20] sm:$0xf] %v394
                %v396 = vld [vmem:[%s376 + $0x48] sm:$0xf]
                %397 = vst [vmem:[%s377 + $0x24] sm:$0xf] %v396
                %v398 = vld [vmem:[%s376 + $0x50] sm:$0xf]
                %399 = vst [vmem:[%s377 + $0x28] sm:$0xf] %v398
                %v400 = vld [vmem:[%s376 + $0x58] sm:$0xf]
                %401 = vst [vmem:[%s377 + $0x2c] sm:$0xf] %v400
                %v402 = vld [vmem:[%s376 + $0x60] sm:$0xf]
                %403 = vst [vmem:[%s377 + $0x30] sm:$0xf] %v402
                %v404 = vld [vmem:[%s376 + $0x68] sm:$0xf]
                %405 = vst [vmem:[%s377 + $0x34] sm:$0xf] %v404
                %v406 = vld [vmem:[%s376 + $0x70] sm:$0xf]
                %407 = vst [vmem:[%s377 + $0x38] sm:$0xf] %v406
                %v408 = vld [vmem:[%s376 + $0x78] sm:$0xf]
                %409 = vst [vmem:[%s377 + $0x3c] sm:$0xf] %v408
              $region82: #{conditional_feed_forward.1} parent=76 // loop_footer
                %s375 = sadd.s32 1, %s371
              $region83: #{conditional_feed_forward.1} parent=76 // loop_footer_branch
                %370 = sbr.rel target = $region79
              $region84: #{conditional_feed_forward.1} parent=76 // loop_exit
                _
            $region77: #{conditional_feed_forward.1} parent=68 // pred_fallthru
              _
          $region69: #{conditional_feed_forward.1} parent=64 // pred_fallthru
            _
          %461 = vnop
        $region65: #{conditional_feed_forward.1} parent=15 // pred_fallthru
          _
        // Predicated region
        $region103: #{conditional_feed_forward.1} parent=15 // pred_check
          %p462 = pneg %p168
        $region104: #{conditional_feed_forward.1} parent=15 // pred_check_branch
          %464 = sbr.rel (%p462) target = $region106
        $region105: #{conditional_feed_forward.1} parent=15 // pred_region
          %s465 = sld [smem:[#allocation3 + %s29]]
          %s466 = sld [smem:[#allocation4 + %s29]]
          %p467 = scmp.gt.s32.totalorder %s466, 0
          %s468 = scalar_select %p467, %s30, 1
          %s469 = smul.u32 16, %s468
          %p470 = scmp.lt.s32.totalorder %s465, 7
          %s471 = scalar_select %p470, %s465, 7
          %p472 = scmp.lt.s32.totalorder %s469, 31
          %s473 = scalar_select %p472, %s469, 31
          %s474 = smul.addr %s471, 32
          %s475 = sadd.s32 %s473, %s474
          %s476 = smul.addr %s475, 4
          %s477 = scalar_lea.vmem %s5, %s476
          %s478 = sld [smem:[#allocation3 + %s29]]
          %s479 = sld [smem:[#allocation4 + %s29]]
          %p480 = scmp.gt.s32.totalorder %s479, 0
          %s481 = scalar_select %p480, %s30, 1
          %s482 = smul.u32 16, %s481
        $region106: #{conditional_feed_forward.1} parent=15 // pred_fallthru
          _
      $region16: #{conditional_feed_forward.1} parent=5 // pred_fallthru
        _
      %p483 = scmp.le.s32.totalorder 1, %s22
      %p484 = scmp.lt.s32.totalorder %s22, 21
      %p485 = pnand %p483, %p484
      %p486 = pneg %p485
      // Predicated region
      $region107: #{conditional_feed_forward.1} parent=5 // pred_check
        _
      $region108: #{conditional_feed_forward.1} parent=5 // pred_check_branch
        %488 = sbr.rel (%p485) target = $region110
      $region109: #{conditional_feed_forward.1} parent=5 // pred_region
        %s489 = ssub.s32 %s22, 1
        %s490 = sand.u32 %s89, 1
        %s491 = sand.u32 %s89, 1
        %s492 = smul.addr %s491, 64
        %s493 = scalar_lea.vmem [#allocation5], %s492
        // Predicated region
        $region111: #{conditional_feed_forward.1} parent=109 // pred_check
          %p494 = pneg %p102
        $region112: #{conditional_feed_forward.1} parent=109 // pred_check_branch
          %496 = sbr.rel (%p494) target = $region114
        $region113: #{conditional_feed_forward.1} parent=109 // pred_region
          _
        $region114: #{conditional_feed_forward.1} parent=109 // pred_fallthru
          _
        %s497 = sand.u32 %s125, 1
        %s498 = sand.u32 %s125, 1
        %s499 = smul.addr %s498, 64
        %s500 = scalar_lea.vmem [#allocation6], %s499
        // Predicated region
        $region115: #{conditional_feed_forward.1} parent=109 // pred_check
          %p501 = pneg %p138
        $region116: #{conditional_feed_forward.1} parent=109 // pred_check_branch
          %503 = sbr.rel (%p501) target = $region118
        $region117: #{conditional_feed_forward.1} parent=109 // pred_region
          _
        $region118: #{conditional_feed_forward.1} parent=109 // pred_fallthru
          _
        %s504 = sld [smem:[#allocation4 + %s31]]
        %p505 = scmp.gt.s32.totalorder %s504, 0
        %s506 = scalar_select %p505, %s31, 0
        %s507 = smul.u32 2, %s506
        %p508 = scmp.lt.s32.totalorder %s507, 19
        %s509 = scalar_select %p508, %s507, 19
        %s510 = smul.addr %s509, 4
        %s511 = scalar_lea.vmem %s2, %s510
        %p512 = pneg %p66
        %p513 = pneg %p63
        %s514 = sand.u32 %s89, 1
        %s515 = sand.u32 %s89, 1
        %s516 = smul.addr %s515, 64
        %s517 = scalar_lea.vmem [#allocation5], %s516
        %p518 = pneg %p102
        %p519 = pneg %p99
        %s520 = sand.u32 %s125, 1
        %s521 = sand.u32 %s125, 1
        %s522 = smul.addr %s521, 64
        %s523 = scalar_lea.vmem [#allocation6], %s522
        %p524 = pneg %p138
        %p525 = pneg %p135
        %s526 = sld [smem:[#allocation3 + %s31]]
        %s527 = sld [smem:[#allocation4 + %s31]]
        %p528 = scmp.gt.s32.totalorder %s527, 0
        %s529 = scalar_select %p528, %s32, 1
        %s530 = smul.u32 16, %s529
        %p531 = scmp.lt.s32.totalorder %s526, 7
        %s532 = scalar_select %p531, %s526, 7
        %p533 = scmp.lt.s32.totalorder %s530, 31
        %s534 = scalar_select %p533, %s530, 31
        %s535 = smul.addr %s532, 32
        %s536 = sadd.s32 %s534, %s535
        %s537 = smul.addr %s536, 4
        %s538 = scalar_lea.vmem %s5, %s537
        %p539 = pneg %p174
        %p540 = pneg %p171
        %p541 = pneg %p200
        %p542 = pneg %p197
        %s543 = smul.u32 2, %s31
        %p544 = scmp.lt.s32.totalorder %s543, 19
        %s545 = scalar_select %p544, %s543, 19
        %s546 = smul.addr %s545, 8
        %s547 = scalar_lea.vmem %s6, %s546
        %s548 = sld [smem:[#allocation4 + %s31]]
        %p549 = scmp.gt.s32.totalorder %s548, 0
        %s550 = scalar_select %p549, %s31, 0
        %s551 = smul.u32 2, %s550
        %p552 = scmp.lt.s32.totalorder %s551, 19
        %s553 = scalar_select %p552, %s551, 19
        %s554 = smul.addr %s553, 4
        %s555 = scalar_lea.vmem %s2, %s554
        %s556 = sld [smem:[#allocation4 + %s31]]
        %p557 = scmp.gt.s32.totalorder %s556, 0
        %s558 = scalar_select %p557, %s31, 0
        %s559 = smul.u32 2, %s558
        %s560 = sld [smem:[#allocation3 + %s31]]
        %s561 = sld [smem:[#allocation4 + %s31]]
        %p562 = scmp.gt.s32.totalorder %s561, 0
        %s563 = scalar_select %p562, %s32, 1
        %s564 = sld [smem:[#allocation3 + %s31]]
        %s565 = sld [smem:[#allocation4 + %s31]]
        %p566 = scmp.gt.s32.totalorder %s565, 0
        %s567 = scalar_select %p566, %s32, 1
        %s568 = sld [smem:[#allocation3 + %s31]]
        %s569 = sld [smem:[#allocation4 + %s31]]
        %p570 = scmp.gt.s32.totalorder %s569, 0
        %s571 = scalar_select %p570, %s32, 1
        %s572 = smul.u32 16, %s571
        %p573 = scmp.lt.s32.totalorder %s568, 7
        %s574 = scalar_select %p573, %s568, 7
        %p575 = scmp.lt.s32.totalorder %s572, 31
        %s576 = scalar_select %p575, %s572, 31
        %s577 = smul.addr %s574, 32
        %s578 = sadd.s32 %s576, %s577
        %s579 = smul.addr %s578, 4
        %s580 = scalar_lea.vmem %s5, %s579
        %s581 = sld [smem:[#allocation3 + %s31]]
        %s582 = sld [smem:[#allocation4 + %s31]]
        %p583 = scmp.gt.s32.totalorder %s582, 0
        %s584 = scalar_select %p583, %s32, 1
        %s585 = smul.u32 16, %s584
        %s586 = smul.u32 2, %s31
        %p587 = scmp.lt.s32.totalorder %s586, 19
        %s588 = scalar_select %p587, %s586, 19
        %s589 = smul.addr %s588, 8
        %s590 = scalar_lea.vmem %s6, %s589
        %s591 = smul.u32 2, %s31
        %s593 = sld [smem:[#allocation4 + %s31]]
        %p594 = scmp.gt.s32.totalorder %s593, 0
        // Predicated region
        $region119: #{conditional_feed_forward.1} parent=109 // pred_check
          %p595 = pneg %p594
        $region120: #{conditional_feed_forward.1} parent=109 // pred_check_branch
          %597 = sbr.rel (%p595) target = $region122
        $region121: #{conditional_feed_forward.1} parent=109 // pred_region
          %v598 = vld [vmem:[%s555] sm:$0xf]
          %v599 = vld [vmem:[%s555 + $0x4] sm:$0xf]
          %v600 = vld [vmem:[%s493] sm:$0xf]
          %v601 = vld [vmem:[%s493 + $0x4] sm:$0xf]
          %v602 = vld [vmem:[%s493 + $0x8] sm:$0xf]
          %v603 = vld [vmem:[%s493 + $0xc] sm:$0xf]
          %v604 = vld [vmem:[%s493 + $0x10] sm:$0xf]
          %v605 = vld [vmem:[%s493 + $0x14] sm:$0xf]
          %v606 = vld [vmem:[%s493 + $0x18] sm:$0xf]
          %v607 = vld [vmem:[%s493 + $0x1c] sm:$0xf]
          %v608 = vld [vmem:[%s493 + $0x20] sm:$0xf]
          %v609 = vld [vmem:[%s493 + $0x24] sm:$0xf]
          %v610 = vld [vmem:[%s493 + $0x28] sm:$0xf]
          %v611 = vld [vmem:[%s493 + $0x2c] sm:$0xf]
          %v612 = vld [vmem:[%s493 + $0x30] sm:$0xf]
          %v613 = vld [vmem:[%s493 + $0x34] sm:$0xf]
          %v614 = vld [vmem:[%s493 + $0x38] sm:$0xf]
          %v615 = vld [vmem:[%s493 + $0x3c] sm:$0xf]
          %v618 = vunpack.c.l.b16 %v598
          %v619 = vunpack.c.l.b16 %v599
          %v620 = vpack.c.b16 %v619, %v618
          %v638 = vunpack.c.l.b16 %v600
          %v639 = vunpack.c.l.b16 %v601
          %v640 = vunpack.c.l.b16 %v602
          %v641 = vunpack.c.l.b16 %v603
          %v642 = vunpack.c.l.b16 %v604
          %v643 = vunpack.c.l.b16 %v605
          %v644 = vunpack.c.l.b16 %v606
          %v645 = vunpack.c.l.b16 %v607
          %v646 = vunpack.c.l.b16 %v608
          %v647 = vunpack.c.l.b16 %v609
          %v648 = vunpack.c.l.b16 %v610
          %v649 = vunpack.c.l.b16 %v611
          %v650 = vunpack.c.l.b16 %v612
          %v651 = vunpack.c.l.b16 %v613
          %v652 = vunpack.c.l.b16 %v614
          %v653 = vunpack.c.l.b16 %v615
          %v654 = vpack.c.b16 %v639, %v638
          %v655 = vpack.c.b16 %v641, %v640
          %v656 = vpack.c.b16 %v643, %v642
          %v657 = vpack.c.b16 %v645, %v644
          %v658 = vpack.c.b16 %v647, %v646
          %v659 = vpack.c.b16 %v649, %v648
          %v660 = vpack.c.b16 %v651, %v650
          %v661 = vpack.c.b16 %v653, %v652
          %670 = vmatprep.subr.bf16.mxu0 0
          %671 = vmatpush1.bf16.msra.mxu0 %v654
          %672 = vmatprep.subr.bf16.mxu0 0
          %673 = vmatpush1.bf16.msra.mxu0 %v655
          %674 = vmatprep.subr.bf16.mxu0 0
          %675 = vmatpush1.bf16.msra.mxu0 %v656
          %676 = vmatprep.subr.bf16.mxu0 0
          %677 = vmatpush1.bf16.msra.mxu0 %v657
          %678 = vmatprep.subr.bf16.mxu0 0
          %679 = vmatpush1.bf16.msra.mxu0 %v658
          %680 = vmatprep.subr.bf16.mxu0 0
          %681 = vmatpush1.bf16.msra.mxu0 %v659
          %682 = vmatprep.subr.bf16.mxu0 0
          %683 = vmatpush1.bf16.msra.mxu0 %v660
          %684 = vmatprep.subr.bf16.mxu0 0
          %685 = vmatpush1.bf16.msra.mxu0 %v661
          %686 = vmatprep.subr.bf16.mxu0 0
          %687 = vmatpush1.bf16.msra.mxu0 0
          %688 = vmatprep.subr.bf16.mxu0 0
          %689 = vmatpush1.bf16.msra.mxu0 0
          %690 = vmatprep.subr.bf16.mxu0 0
          %691 = vmatpush1.bf16.msra.mxu0 0
          %692 = vmatprep.subr.bf16.mxu0 0
          %693 = vmatpush1.bf16.msra.mxu0 0
          %694 = vmatprep.subr.bf16.mxu0 0
          %695 = vmatpush1.bf16.msra.mxu0 0
          %696 = vmatprep.subr.bf16.mxu0 0
          %697 = vmatpush1.bf16.msra.mxu0 0
          %698 = vmatprep.subr.bf16.mxu0 0
          %699 = vmatpush1.bf16.msra.mxu0 0
          %700 = vmatprep.subr.bf16.mxu0 0
          %701 = vmatpush1.bf16.msra.mxu0 0
          %702 = vmatprep.mubr.bf16.mxu0 0
          %703 = vmatmul.mubr.bf16.gmra.mrb[0].mxu0 %v620
          %v704 = vpop.f32.mrb[0].mxu0
          %v705 = vadd.f32 0.0, %v704
          %v706 = vpop.f32.mrb[0].mxu0
          %v707 = vpop.f32.mrb[0].mxu0
          %v708 = vadd.f32 0.0, %v707
          %v709 = vpop.f32.mrb[0].mxu0
          %710 = vdwg.mxu0
          %v711 = vld [vmem:[%s500] sm:$0xf]
          %v712 = vld [vmem:[%s500 + $0x4] sm:$0xf]
          %v713 = vld [vmem:[%s500 + $0x8] sm:$0xf]
          %v714 = vld [vmem:[%s500 + $0xc] sm:$0xf]
          %v715 = vld [vmem:[%s500 + $0x10] sm:$0xf]
          %v716 = vld [vmem:[%s500 + $0x14] sm:$0xf]
          %v717 = vld [vmem:[%s500 + $0x18] sm:$0xf]
          %v718 = vld [vmem:[%s500 + $0x1c] sm:$0xf]
          %v719 = vld [vmem:[%s500 + $0x20] sm:$0xf]
          %v720 = vld [vmem:[%s500 + $0x24] sm:$0xf]
          %v721 = vld [vmem:[%s500 + $0x28] sm:$0xf]
          %v722 = vld [vmem:[%s500 + $0x2c] sm:$0xf]
          %v723 = vld [vmem:[%s500 + $0x30] sm:$0xf]
          %v724 = vld [vmem:[%s500 + $0x34] sm:$0xf]
          %v725 = vld [vmem:[%s500 + $0x38] sm:$0xf]
          %v726 = vld [vmem:[%s500 + $0x3c] sm:$0xf]
          %v743 = vunpack.c.l.b16 %v711
          %v744 = vunpack.c.l.b16 %v712
          %v745 = vunpack.c.l.b16 %v713
          %v746 = vunpack.c.l.b16 %v714
          %v747 = vunpack.c.l.b16 %v715
          %v748 = vunpack.c.l.b16 %v716
          %v749 = vunpack.c.l.b16 %v717
          %v750 = vunpack.c.l.b16 %v718
          %v751 = vunpack.c.l.b16 %v719
          %v752 = vunpack.c.l.b16 %v720
          %v753 = vunpack.c.l.b16 %v721
          %v754 = vunpack.c.l.b16 %v722
          %v755 = vunpack.c.l.b16 %v723
          %v756 = vunpack.c.l.b16 %v724
          %v757 = vunpack.c.l.b16 %v725
          %v758 = vunpack.c.l.b16 %v726
          %v759 = vpack.c.b16 %v744, %v743
          %v760 = vpack.c.b16 %v746, %v745
          %v761 = vpack.c.b16 %v748, %v747
          %v762 = vpack.c.b16 %v750, %v749
          %v763 = vpack.c.b16 %v752, %v751
          %v764 = vpack.c.b16 %v754, %v753
          %v765 = vpack.c.b16 %v756, %v755
          %v766 = vpack.c.b16 %v758, %v757
          %775 = vmatprep.subr.bf16.mxu0 0
          %776 = vmatpush1.bf16.msra.mxu0 %v759
          %777 = vmatprep.subr.bf16.mxu0 0
          %778 = vmatpush1.bf16.msra.mxu0 %v760
          %779 = vmatprep.subr.bf16.mxu0 0
          %780 = vmatpush1.bf16.msra.mxu0 %v761
          %781 = vmatprep.subr.bf16.mxu0 0
          %782 = vmatpush1.bf16.msra.mxu0 %v762
          %783 = vmatprep.subr.bf16.mxu0 0
          %784 = vmatpush1.bf16.msra.mxu0 %v763
          %785 = vmatprep.subr.bf16.mxu0 0
          %786 = vmatpush1.bf16.msra.mxu0 %v764
          %787 = vmatprep.subr.bf16.mxu0 0
          %788 = vmatpush1.bf16.msra.mxu0 %v765
          %789 = vmatprep.subr.bf16.mxu0 0
          %790 = vmatpush1.bf16.msra.mxu0 %v766
          %791 = vmatprep.subr.bf16.mxu0 0
          %792 = vmatpush1.bf16.msra.mxu0 0
          %793 = vmatprep.subr.bf16.mxu0 0
          %794 = vmatpush1.bf16.msra.mxu0 0
          %795 = vmatprep.subr.bf16.mxu0 0
          %796 = vmatpush1.bf16.msra.mxu0 0
          %797 = vmatprep.subr.bf16.mxu0 0
          %798 = vmatpush1.bf16.msra.mxu0 0
          %799 = vmatprep.subr.bf16.mxu0 0
          %800 = vmatpush1.bf16.msra.mxu0 0
          %801 = vmatprep.subr.bf16.mxu0 0
          %802 = vmatpush1.bf16.msra.mxu0 0
          %803 = vmatprep.subr.bf16.mxu0 0
          %804 = vmatpush1.bf16.msra.mxu0 0
          %805 = vmatprep.subr.bf16.mxu0 0
          %806 = vmatpush1.bf16.msra.mxu0 0
          %807 = vmatprep.mubr.bf16.mxu0 0
          %808 = vmatmul.mubr.bf16.gmra.mrb[0].mxu0 %v620
          %v809 = vpop.f32.mrb[0].mxu0
          %v810 = vadd.f32 0.0, %v809
          %v811 = vpop.f32.mrb[0].mxu0
          %v812 = vpop.f32.mrb[0].mxu0
          %v813 = vadd.f32 0.0, %v812
          %v814 = vpop.f32.mrb[0].mxu0
          %815 = vdwg.mxu0
          %v816 = vxor.u32 %v705, 2147483648
          %v817 = vxor.u32 %v708, 2147483648
          %v818 = vmul.f32 %v816, 1.442695
          %v819 = vpow.pop %v818
          %v820 = vmul.f32 %v817, 1.442695
          %v821 = vpow.pop %v820
          %v822 = vadd.f32 %v819, 1.0
          %v823 = vadd.f32 %v821, 1.0
          %v824 = vrcp.pop %v822
          %v825 = vmul.f32 1.0, %v824
          %v826 = vrcp.pop %v823
          %v827 = vmul.f32 1.0, %v826
          %v828 = vmul.f32 %v705, %v825
          %v829 = vmul.f32 %v708, %v827
          %v830 = vmul.f32 %v828, %v810
          %v831 = vmul.f32 %v829, %v813
          %v832 = vpack.c.bf16 %v831, %v830
          %v833 = vld [vmem:[%s580] sm:$0xf]
          %v834 = vld [vmem:[%s580 + $0x4] sm:$0xf]
          %v835 = vld [vmem:[%s580 + $0x8] sm:$0xf]
          %v836 = vld [vmem:[%s580 + $0xc] sm:$0xf]
          %v837 = vld [vmem:[%s580 + $0x10] sm:$0xf]
          %v838 = vld [vmem:[%s580 + $0x14] sm:$0xf]
          %v839 = vld [vmem:[%s580 + $0x18] sm:$0xf]
          %v840 = vld [vmem:[%s580 + $0x1c] sm:$0xf]
          %v841 = vld [vmem:[%s580 + $0x20] sm:$0xf]
          %v842 = vld [vmem:[%s580 + $0x24] sm:$0xf]
          %v843 = vld [vmem:[%s580 + $0x28] sm:$0xf]
          %v844 = vld [vmem:[%s580 + $0x2c] sm:$0xf]
          %v845 = vld [vmem:[%s580 + $0x30] sm:$0xf]
          %v846 = vld [vmem:[%s580 + $0x34] sm:$0xf]
          %v847 = vld [vmem:[%s580 + $0x38] sm:$0xf]
          %v848 = vld [vmem:[%s580 + $0x3c] sm:$0xf]
          %v865 = vunpack.c.l.b16 %v833
          %v866 = vunpack.c.l.b16 %v834
          %v867 = vunpack.c.l.b16 %v835
          %v868 = vunpack.c.l.b16 %v836
          %v869 = vunpack.c.l.b16 %v837
          %v870 = vunpack.c.l.b16 %v838
          %v871 = vunpack.c.l.b16 %v839
          %v872 = vunpack.c.l.b16 %v840
          %v873 = vunpack.c.l.b16 %v841
          %v874 = vunpack.c.l.b16 %v842
          %v875 = vunpack.c.l.b16 %v843
          %v876 = vunpack.c.l.b16 %v844
          %v877 = vunpack.c.l.b16 %v845
          %v878 = vunpack.c.l.b16 %v846
          %v879 = vunpack.c.l.b16 %v847
          %v880 = vunpack.c.l.b16 %v848
          %v881 = vpack.c.b16 %v866, %v865
          %v882 = vpack.c.b16 %v868, %v867
          %v883 = vpack.c.b16 %v870, %v869
          %v884 = vpack.c.b16 %v872, %v871
          %v885 = vpack.c.b16 %v874, %v873
          %v886 = vpack.c.b16 %v876, %v875
          %v887 = vpack.c.b16 %v878, %v877
          %v888 = vpack.c.b16 %v880, %v879
          %897 = vmatprep.subr.bf16.mxu0 0
          %898 = vmatpush1.bf16.msra.mxu0 %v881
          %899 = vmatprep.subr.bf16.mxu0 0
          %900 = vmatpush1.bf16.msra.mxu0 %v882
          %901 = vmatprep.subr.bf16.mxu0 0
          %902 = vmatpush1.bf16.msra.mxu0 %v883
          %903 = vmatprep.subr.bf16.mxu0 0
          %904 = vmatpush1.bf16.msra.mxu0 %v884
          %905 = vmatprep.subr.bf16.mxu0 0
          %906 = vmatpush1.bf16.msra.mxu0 %v885
          %907 = vmatprep.subr.bf16.mxu0 0
          %908 = vmatpush1.bf16.msra.mxu0 %v886
          %909 = vmatprep.subr.bf16.mxu0 0
          %910 = vmatpush1.bf16.msra.mxu0 %v887
          %911 = vmatprep.subr.bf16.mxu0 0
          %912 = vmatpush1.bf16.msra.mxu0 %v888
          %913 = vmatprep.subr.bf16.mxu0 0
          %914 = vmatpush1.bf16.msra.mxu0 0
          %915 = vmatprep.subr.bf16.mxu0 0
          %916 = vmatpush1.bf16.msra.mxu0 0
          %917 = vmatprep.subr.bf16.mxu0 0
          %918 = vmatpush1.bf16.msra.mxu0 0
          %919 = vmatprep.subr.bf16.mxu0 0
          %920 = vmatpush1.bf16.msra.mxu0 0
          %921 = vmatprep.subr.bf16.mxu0 0
          %922 = vmatpush1.bf16.msra.mxu0 0
          %923 = vmatprep.subr.bf16.mxu0 0
          %924 = vmatpush1.bf16.msra.mxu0 0
          %925 = vmatprep.subr.bf16.mxu0 0
          %926 = vmatpush1.bf16.msra.mxu0 0
          %927 = vmatprep.subr.bf16.mxu0 0
          %928 = vmatpush1.bf16.msra.mxu0 0
          %929 = vmatprep.mubr.bf16.mxu0 0
          %930 = vmatmul.mubr.bf16.gmra.mrb[0].mxu0 %v832
          %v931 = vpop.f32.mrb[0].mxu0
          %v932 = vadd.f32 0.0, %v931
          %v933 = vpop.f32.mrb[0].mxu0
          %v934 = vpop.f32.mrb[0].mxu0
          %v935 = vadd.f32 0.0, %v934
          %v936 = vpop.f32.mrb[0].mxu0
          %937 = vdwg.mxu0
          %p938 = scmp.eq.s32.totalorder %s32, 0
          // Predicated region
          $region123: #{conditional_feed_forward.1} parent=121 // pred_check
            %p939 = pneg %p938
          $region124: #{conditional_feed_forward.1} parent=121 // pred_check_branch
            %941 = sbr.rel (%p939) target = $region126
          $region125: #{conditional_feed_forward.1} parent=121 // pred_region
            %942 = vst [vmem:[%s590] sm:$0xff] %v932
            %943 = vst [vmem:[%s590 + $0x8] sm:$0xff] %v935
          $region126: #{conditional_feed_forward.1} parent=121 // pred_fallthru
            _
          %p944 = scmp.gt.s32.totalorder %s32, 0
          // Predicated region
          $region127: #{conditional_feed_forward.1} parent=121 // pred_check
            %p945 = pneg %p944
          $region128: #{conditional_feed_forward.1} parent=121 // pred_check_branch
            %947 = sbr.rel (%p945) target = $region130
          $region129: #{conditional_feed_forward.1} parent=121 // pred_region
            %v948 = vld [vmem:[%s590] sm:$0xff]
            %v949 = vld [vmem:[%s590 + $0x8] sm:$0xff]
            %v950 = vadd.f32 %v948, %v932
            %v951 = vadd.f32 %v949, %v935
            %952 = vst [vmem:[%s590] sm:$0xff] %v950
            %953 = vst [vmem:[%s590 + $0x8] sm:$0xff] %v951
          $region130: #{conditional_feed_forward.1} parent=121 // pred_fallthru
            _
        $region122: #{conditional_feed_forward.1} parent=109 // pred_fallthru
          _
        %s954 = smul.u32 2, %s31
        %p955 = scmp.lt.s32.totalorder %s954, 19
        %s956 = scalar_select %p955, %s954, 19
        %s957 = smul.addr %s956, 8
        %s958 = scalar_lea.vmem %s6, %s957
        // Predicated region
        $region131: #{conditional_feed_forward.1} parent=109 // pred_check
          %p959 = pneg %p197
        $region132: #{conditional_feed_forward.1} parent=109 // pred_check_branch
          %961 = sbr.rel (%p959) target = $region134
        $region133: #{conditional_feed_forward.1} parent=109 // pred_region
          %s962 = smul.u32 2, %s31
        $region134: #{conditional_feed_forward.1} parent=109 // pred_fallthru
          _
      $region110: #{conditional_feed_forward.1} parent=5 // pred_fallthru
        _
      %p963 = scmp.le.s32.totalorder 2, %s22
      // Predicated region
      $region135: #{conditional_feed_forward.1} parent=5 // pred_check
        %p964 = pneg %p963
      $region136: #{conditional_feed_forward.1} parent=5 // pred_check_branch
        %966 = sbr.rel (%p964) target = $region138
      $region137: #{conditional_feed_forward.1} parent=5 // pred_region
        %s967 = ssub.s32 %s22, 2
        // Predicated region
        $region139: #{conditional_feed_forward.1} parent=137 // pred_check
          %p968 = pneg %p203
        $region140: #{conditional_feed_forward.1} parent=137 // pred_check_branch
          %970 = sbr.rel (%p968) target = $region142
        $region141: #{conditional_feed_forward.1} parent=137 // pred_region
          %s971 = smul.u32 2, %s33
          %p972 = scmp.lt.s32.totalorder %s971, 19
          %s973 = scalar_select %p972, %s971, 19
          %s974 = smul.addr %s973, 8
          %s975 = scalar_lea.vmem %s6, %s974
        $region142: #{conditional_feed_forward.1} parent=137 // pred_fallthru
          _
      $region138: #{conditional_feed_forward.1} parent=5 // pred_fallthru
        _
    $region6: #{conditional_feed_forward.1} parent=1 // loop_footer
      %s26 = sadd.s32 1, %s22
    $region7: #{conditional_feed_forward.1} parent=1 // loop_footer_branch
      %21 = sbr.rel target = $region3
    $region8: #{conditional_feed_forward.1} parent=1 // loop_exit
      _

</llo_original>
